<compile_context>
chip_gen: v5e
topology: v5e:2x2
jax: 0.10.0
libtpu: 0.0.40
codegen_flags: <defaults>
</compile_context>

<pallas_src>
import jax
import jax.numpy as jnp
from jax import lax
from jax.experimental import pallas as pl
from jax.experimental.pallas import tpu as pltpu


def _prototype_match_kernel(x_ref, w_ref, b_ref, pw_ref, res_ref):
    # x_ref:   (block_b, T, D)     input block
    # w_ref:   (K, D)              linear weight (PyTorch layout, untransposed)
    # b_ref:   (K, 1)              bias as a column for (K, *) broadcast
    # pw_ref:  (block_b, K, T)     output: relu(linear) already transposed
    # res_ref: (1, block_b, K*D)   output: protoweight @ inputs, flat lane-dense
    block_b, t, d = x_ref.shape
    k = w_ref.shape[0]

    w = w_ref[...]                                   # (K, D)
    bias = b_ref[...]                                # (K, 1)

    # ---- First matmul, batched over the packed batch elements -------------
    # (K, block_b*T): contract D of (K, D) against D of (block_b*T, D).
    # One MXU push and one bias+ReLU pass per grid step, lane-dense along b*T.
    x_flat = x_ref[...].reshape(block_b * t, d)      # free collapse (T % 8 == 0)
    logits = lax.dot_general(
        w, x_flat,
        dimension_numbers=(((1,), (1,)), ((), ())),
        preferred_element_type=jnp.float32)          # (K, block_b*T)
    pw_all = jnp.maximum(logits + bias, 0.0).astype(pw_ref.dtype)

    # ---- Per batch element: pw store + tiny second matmul -----------------
    # TODO(synk): for very long T, chunk this over T with a (K, D) f32
    # accumulator to bound live ranges; unnecessary at these sizes.
    rows = []
    for i in range(block_b):
        pw_i = pw_all[:, i * t:(i + 1) * t]          # (K, T) static lane slice
        pw_ref[i] = pw_i

        x_i = x_ref[i]                               # (T, D)
        # (K, D) = (K, T) @ (T, D); pw fed at the input dtype so bf16 inputs
        # are never upcast; accumulation stays f32 via preferred_element_type.
        res = lax.dot_general(
            pw_i.astype(x_i.dtype), x_i,
            dimension_numbers=(((1,), (0,)), ((), ())),
            preferred_element_type=jnp.float32)      # (K, D)
        # Row-major flatten of the K rows into one lane-dense (1, K*D) row.
        rows.append(jnp.concatenate([res[j:j + 1, :] for j in range(k)],
                                    axis=-1))

    # Single store per grid step (avoids block_b masked 1-sublane stores).
    stacked = jnp.concatenate(rows, axis=0)          # (block_b, K*D)
    res_ref[0] = stacked.astype(res_ref.dtype)


def _round_up(x, m):
    return ((x + m - 1) // m) * m


def _sublane_multiple(itemsize):
    # f32 -> 8, bf16 -> 16, int8/fp8 -> 32 (sub-32-bit dtypes pack sublanes).
    return max(8, 32 // max(1, itemsize))


def _padded_vmem_bytes(shape, itemsize):
    """Bytes of one VMEM buffer of `shape`, padded to (8,128)-style tiles."""
    if len(shape) == 1:
        return _round_up(shape[0] * itemsize, 512)
    lane = _round_up(shape[-1], 128)
    sub = _round_up(shape[-2], _sublane_multiple(itemsize))
    lead = 1
    for s in shape[:-2]:
        lead *= s
    return lead * sub * lane * itemsize


def _num_tensorcores_per_chip():
    try:
        kind = jax.devices()[0].device_kind.lower()
    except Exception:
        return 1
    return 2 if "v7" in kind else 1          # v5e/v6e: 1 TC; v7x: 2 TCs


def _pick_block_b(B, T, D, itemsize, num_cores):
    """How many batch elements to pack per grid step.

    Amortizes the ~0.35 us per-step overhead while (a) keeping the padded x
    block under a generation-aware VMEM budget and (b) leaving >=2 grid steps
    per TensorCore on multi-core (v7x) chips so every core gets pipelined
    work.  Single-core chips may collapse small B into one step.
    """
    x_bytes_per_b = _padded_vmem_bytes((1, T, D), itemsize)
    budget = (4 if num_cores > 1 else 6) * 1024 * 1024
    cap = max(1, budget // max(1, x_bytes_per_b))

    if num_cores > 1 and B >= 2 * num_cores:
        min_steps = 2 * num_cores
    elif num_cores > 1 and B >= num_cores:
        min_steps = num_cores
    else:
        min_steps = 1

    best = 1
    for cand in range(1, B + 1):
        if B % cand != 0 or cand > cap:
            continue
        if (B // cand) < min_steps:
            continue
        best = cand
    return best


def prototype_match(inputs, weight, bias, block_b=None):
    """inputs: (B, T, D); weight: (K, D) PyTorch layout; bias: (K,)."""
    B, T, D = inputs.shape
    K, D_w = weight.shape
    assert D_w == D and bias.shape == (K,)

    itemsize = jnp.dtype(inputs.dtype).itemsize
    num_cores = _num_tensorcores_per_chip()
    if block_b is None:
        block_b = _pick_block_b(B, T, D, itemsize, num_cores)
    assert B % block_b == 0
    grid_b = B // block_b

    bias_col = bias.reshape(K, 1)                    # (K, 1) for (K, *) broadcast

    out_shapes = (
        jax.ShapeDtypeStruct((B, K, T), inputs.dtype),                 # pw^T
        jax.ShapeDtypeStruct((grid_b, block_b, K * D), inputs.dtype),  # result slab
    )

    grid_spec = pltpu.PrefetchScalarGridSpec(
        num_scalar_prefetch=0,
        grid=(grid_b,),
        in_specs=[
            pl.BlockSpec((block_b, T, D), lambda i: (i, 0, 0)),
            pl.BlockSpec((K, D), lambda i: (0, 0)),       # weight, resident
            pl.BlockSpec((K, 1), lambda i: (0, 0)),       # bias, resident
        ],
        out_specs=[
            pl.BlockSpec((block_b, K, T), lambda i: (i, 0, 0)),
            pl.BlockSpec((1, block_b, K * D), lambda i: (i, 0, 0)),
        ],
    )

    # Advisory hint for XLA's scheduler (memory-bound, two tiny matmuls).
    cost = pl.CostEstimate(
        flops=4 * B * T * K * D,
        transcendentals=0,
        bytes_accessed=itemsize * (B * T * D + K * D + K + B * K * T + B * K * D),
    )

    # (8,128)-layout-padded VMEM estimate (default double-buffering everywhere).
    vmem_est = (
        2 * _padded_vmem_bytes((block_b, T, D), itemsize)
        + 2 * _padded_vmem_bytes((block_b, K, T), itemsize)
        + 2 * _padded_vmem_bytes((1, block_b, K * D), itemsize)
        + 2 * _padded_vmem_bytes((K, D), itemsize)
        + 2 * _padded_vmem_bytes((K, 1), itemsize)
    )
    cp_kwargs = dict(dimension_semantics=("parallel",))
    if vmem_est > 12 * 1024 * 1024:
        # Raise the scoped limit only when the padded estimate threatens the
        # smallest default (16 MiB on v5e); cap well below v7x's 64 MiB
        # physical VMEM to leave headroom for Mosaic internal scratch.
        cp_kwargs["vmem_limit_bytes"] = int(
            min(max(int(1.5 * vmem_est), 16 * 1024 * 1024), 48 * 1024 * 1024))

    pw, res_slab = pl.pallas_call(
        _prototype_match_kernel,
        out_shape=out_shapes,
        grid_spec=grid_spec,
        cost_estimate=cost,
        compiler_params=pltpu.CompilerParams(**cp_kwargs),
    )(inputs, weight, bias_col)

    # Free, row-major-contiguous reshape (layout plumbing only).
    result = res_slab.reshape(B, K, D)
    return pw, result


def prototype_match_ref(inputs, weight, bias):
    """Pure-JAX reference mirroring the PyTorch forward."""
    pw = jax.nn.relu(jnp.einsum("btd,kd->btk", inputs, weight) + bias)  # (B,T,K)
    pwt = jnp.transpose(pw, (0, 2, 1))                                   # (B,K,T)
    res = jnp.einsum("bkt,btd->bkd", pwt, inputs)                        # (B,K,D)
    return pwt, res


if __name__ == "__main__":
    # Small shapes consistent with the module: prototype_num=4, vid_dim=32.
    B, T, D, K = 2, 8, 32, 4
    key = jax.random.PRNGKey(0)
    k_x, k_w, k_b = jax.random.split(key, 3)

    inputs = jax.random.normal(k_x, (B, T, D), dtype=jnp.float32)
    # Deterministic parameter init (PyTorch-like uniform(-1/sqrt(D), 1/sqrt(D))).
    bound = 1.0 / (D ** 0.5)
    weight = jax.random.uniform(k_w, (K, D), dtype=jnp.float32,
                                minval=-bound, maxval=bound)
    bias = jax.random.uniform(k_b, (K,), dtype=jnp.float32,
                              minval=-bound, maxval=bound)

    pw, res = prototype_match(inputs, weight, bias)
    jax.block_until_ready((pw, res))

    pw_ref, res_ref = prototype_match_ref(inputs, weight, bias)
    assert pw.shape == (B, K, T) and res.shape == (B, K, D)
    assert jnp.allclose(pw, pw_ref, atol=1e-5, rtol=1e-5)
    assert jnp.allclose(res, res_ref, atol=1e-5, rtol=1e-5)

    print("KERNEL_OK")
</pallas_src>

<mosaic_0001>
module attributes {stable_mosaic.version = 11 : i64} {
  func.func @_prototype_match_kernel(%arg0: i32, %arg1: memref<2x8x32xf32, #tpu.memory_space<vmem>>, %arg2: memref<4x32xf32, #tpu.memory_space<vmem>>, %arg3: memref<4x1xf32, #tpu.memory_space<vmem>>, %arg4: memref<2x4x8xf32, #tpu.memory_space<vmem>>, %arg5: memref<1x2x128xf32, #tpu.memory_space<vmem>>) attributes {dimension_semantics = [#tpu.dimension_semantics<parallel>], iteration_bounds = array<i64: 1>, scalar_prefetch = 0 : i64, scratch_operands = 0 : i64, tpu.core_type = #tpu.core_type<tc>, window_params = [{transform_indices = @transform_0, window_bounds = array<i64: 2, 8, 32>}, {pipeline_mode = #tpu.pipeline_mode<synchronous>, transform_indices = @transform_1, window_bounds = array<i64: 4, 32>}, {pipeline_mode = #tpu.pipeline_mode<synchronous>, transform_indices = @transform_2, window_bounds = array<i64: 4, 1>}, {transform_indices = @transform_3, window_bounds = array<i64: 2, 4, 8>}, {transform_indices = @transform_4, window_bounds = array<i64: 1, 2, 128>}]} {
    %c0 = arith.constant 0 : index
    %c0_0 = arith.constant 0 : index
    %0 = vector.load %arg2[%c0, %c0_0] : memref<4x32xf32, #tpu.memory_space<vmem>>, vector<4x32xf32>
    %c0_1 = arith.constant 0 : index
    %c0_2 = arith.constant 0 : index
    %1 = vector.load %arg3[%c0_1, %c0_2] : memref<4x1xf32, #tpu.memory_space<vmem>>, vector<4x1xf32>
    %c0_3 = arith.constant 0 : index
    %c0_4 = arith.constant 0 : index
    %c0_5 = arith.constant 0 : index
    %2 = vector.load %arg1[%c0_3, %c0_4, %c0_5] : memref<2x8x32xf32, #tpu.memory_space<vmem>>, vector<2x8x32xf32>
    %3 = vector.shape_cast %2 : vector<2x8x32xf32> to vector<16x32xf32>
    %cst = arith.constant dense<0.000000e+00> : vector<4x16xf32>
    %4 = tpu.matmul %0, %3, %cst {dimension_numbers = #tpu.dot_dimension_numbers<[1], [1], [0], [0], [0, 0, 1, 0], [], []>} : vector<4x32xf32>, vector<16x32xf32>, vector<4x16xf32> -> vector<4x16xf32>
    %5 = vector.broadcast %1 : vector<4x1xf32> to vector<4x16xf32>
    %6 = arith.addf %4, %5 : vector<4x16xf32>
    %cst_6 = arith.constant 0.000000e+00 : f32
    %7 = vector.broadcast %cst_6 : f32 to vector<4x16xf32>
    %8 = arith.maximumf %6, %7 : vector<4x16xf32>
    %9 = vector.extract_strided_slice %8 {offsets = [0, 0], sizes = [4, 8], strides = [1, 1]} : vector<4x16xf32> to vector<4x8xf32>
    %c0_7 = arith.constant 0 : index
    %c0_8 = arith.constant 0 : index
    %c0_9 = arith.constant 0 : index
    %10 = vector.load %arg4[%c0_7, %c0_8, %c0_9] : memref<2x4x8xf32, #tpu.memory_space<vmem>>, vector<1x4x8xf32>
    %11 = vector.shape_cast %10 : vector<1x4x8xf32> to vector<4x8xf32>
    %12 = vector.shape_cast %9 : vector<4x8xf32> to vector<1x4x8xf32>
    tpu.vector_store %arg4[%c0_7, %c0_8, %c0_9], %12 {strides = array<i32>} : memref<2x4x8xf32, #tpu.memory_space<vmem>>, vector<1x4x8xf32>,
    %c0_10 = arith.constant 0 : index
    %c0_11 = arith.constant 0 : index
    %c0_12 = arith.constant 0 : index
    %13 = vector.load %arg1[%c0_10, %c0_11, %c0_12] : memref<2x8x32xf32, #tpu.memory_space<vmem>>, vector<1x8x32xf32>
    %14 = vector.shape_cast %13 : vector<1x8x32xf32> to vector<8x32xf32>
    %cst_13 = arith.constant dense<0.000000e+00> : vector<4x32xf32>
    %15 = tpu.matmul %9, %14, %cst_13 {dimension_numbers = #tpu.dot_dimension_numbers<[1], [0], [0], [1], [0, 0, 1, 1], [], []>} : vector<4x8xf32>, vector<8x32xf32>, vector<4x32xf32> -> vector<4x32xf32>
    %16 = vector.extract_strided_slice %15 {offsets = [0, 0], sizes = [1, 32], strides = [1, 1]} : vector<4x32xf32> to vector<1x32xf32>
    %17 = vector.extract_strided_slice %15 {offsets = [1, 0], sizes = [1, 32], strides = [1, 1]} : vector<4x32xf32> to vector<1x32xf32>
    %18 = vector.extract_strided_slice %15 {offsets = [2, 0], sizes = [1, 32], strides = [1, 1]} : vector<4x32xf32> to vector<1x32xf32>
    %19 = vector.extract_strided_slice %15 {offsets = [3, 0], sizes = [1, 32], strides = [1, 1]} : vector<4x32xf32> to vector<1x32xf32>
    %20 = tpu.concatenate %16, %17, %18, %19 in 1 : vector<1x32xf32>, vector<1x32xf32>, vector<1x32xf32>, vector<1x32xf32> -> vector<1x128xf32>
    %21 = vector.extract_strided_slice %8 {offsets = [0, 8], sizes = [4, 8], strides = [1, 1]} : vector<4x16xf32> to vector<4x8xf32>
    %c1 = arith.constant 1 : index
    %c0_14 = arith.constant 0 : index
    %c0_15 = arith.constant 0 : index
    %22 = vector.load %arg4[%c1, %c0_14, %c0_15] : memref<2x4x8xf32, #tpu.memory_space<vmem>>, vector<1x4x8xf32>
    %23 = vector.shape_cast %22 : vector<1x4x8xf32> to vector<4x8xf32>
    %24 = vector.shape_cast %21 : vector<4x8xf32> to vector<1x4x8xf32>
    tpu.vector_store %arg4[%c1, %c0_14, %c0_15], %24 {strides = array<i32>} : memref<2x4x8xf32, #tpu.memory_space<vmem>>, vector<1x4x8xf32>,
    %c1_16 = arith.constant 1 : index
    %c0_17 = arith.constant 0 : index
    %c0_18 = arith.constant 0 : index
    %25 = vector.load %arg1[%c1_16, %c0_17, %c0_18] : memref<2x8x32xf32, #tpu.memory_space<vmem>>, vector<1x8x32xf32>
    %26 = vector.shape_cast %25 : vector<1x8x32xf32> to vector<8x32xf32>
    %cst_19 = arith.constant dense<0.000000e+00> : vector<4x32xf32>
    %27 = tpu.matmul %21, %26, %cst_19 {dimension_numbers = #tpu.dot_dimension_numbers<[1], [0], [0], [1], [0, 0, 1, 1], [], []>} : vector<4x8xf32>, vector<8x32xf32>, vector<4x32xf32> -> vector<4x32xf32>
    %28 = vector.extract_strided_slice %27 {offsets = [0, 0], sizes = [1, 32], strides = [1, 1]} : vector<4x32xf32> to vector<1x32xf32>
    %29 = vector.extract_strided_slice %27 {offsets = [1, 0], sizes = [1, 32], strides = [1, 1]} : vector<4x32xf32> to vector<1x32xf32>
    %30 = vector.extract_strided_slice %27 {offsets = [2, 0], sizes = [1, 32], strides = [1, 1]} : vector<4x32xf32> to vector<1x32xf32>
    %31 = vector.extract_strided_slice %27 {offsets = [3, 0], sizes = [1, 32], strides = [1, 1]} : vector<4x32xf32> to vector<1x32xf32>
    %32 = tpu.concatenate %28, %29, %30, %31 in 1 : vector<1x32xf32>, vector<1x32xf32>, vector<1x32xf32>, vector<1x32xf32> -> vector<1x128xf32>
    %33 = tpu.concatenate %20, %32 in 0 : vector<1x128xf32>, vector<1x128xf32> -> vector<2x128xf32>
    %c0_20 = arith.constant 0 : index
    %c0_21 = arith.constant 0 : index
    %c0_22 = arith.constant 0 : index
    %34 = vector.load %arg5[%c0_20, %c0_21, %c0_22] : memref<1x2x128xf32, #tpu.memory_space<vmem>>, vector<1x2x128xf32>
    %35 = vector.shape_cast %34 : vector<1x2x128xf32> to vector<2x128xf32>
    %36 = vector.shape_cast %33 : vector<2x128xf32> to vector<1x2x128xf32>
    tpu.vector_store %arg5[%c0_20, %c0_21, %c0_22], %36 {strides = array<i32>} : memref<1x2x128xf32, #tpu.memory_space<vmem>>, vector<1x2x128xf32>,
    return
  }
  func.func @transform_0(%arg0: i32) -> (i32, i32, i32) {
    %c0_i32 = arith.constant 0 : i32
    %c0_i32_0 = arith.constant 0 : i32
    %c0_i32_1 = arith.constant 0 : i32
    return %arg0, %c0_i32, %c0_i32_0 : i32, i32, i32
  }
  func.func @transform_1(%arg0: i32) -> (i32, i32) {
    %c0_i32 = arith.constant 0 : i32
    %c0_i32_0 = arith.constant 0 : i32
    %c0_i32_1 = arith.constant 0 : i32
    return %c0_i32, %c0_i32_0 : i32, i32
  }
  func.func @transform_2(%arg0: i32) -> (i32, i32) {
    %c0_i32 = arith.constant 0 : i32
    %c0_i32_0 = arith.constant 0 : i32
    %c0_i32_1 = arith.constant 0 : i32
    return %c0_i32, %c0_i32_0 : i32, i32
  }
  func.func @transform_3(%arg0: i32) -> (i32, i32, i32) {
    %c0_i32 = arith.constant 0 : i32
    %c0_i32_0 = arith.constant 0 : i32
    %c0_i32_1 = arith.constant 0 : i32
    return %arg0, %c0_i32, %c0_i32_0 : i32, i32, i32
  }
  func.func @transform_4(%arg0: i32) -> (i32, i32, i32) {
    %c0_i32 = arith.constant 0 : i32
    %c0_i32_0 = arith.constant 0 : i32
    %c0_i32_1 = arith.constant 0 : i32
    return %arg0, %c0_i32, %c0_i32_0 : i32, i32, i32
  }
}

</mosaic_0001>

<llo_original>
// kernel: tpu_custom_call.1
$region0: #{tpu_custom_call.1}
  #allocation0 [shape = 'u32[]', space=smem, size = 0x4, offset = 0x4, fixed_abs, tag = 'smem constant byte address 0x4 - core index']
  #allocation1 [shape = 'u32[72,128]{1,0:T(1,128)}', space=vmem, size = 0x9000, scoped, tag = 'internal scratch']
  %s0 = inlined_call_operand.hbm [shape: f32[2,8,32], index: 0, kind: input, shape index: {}]
  %s1 = inlined_call_operand.vmem [shape: f32[4,32], index: 1, kind: input, shape index: {}]
  %s2 = inlined_call_operand.vmem [shape: f32[4,1], index: 2, kind: input, shape index: {}]
  %s3 = inlined_call_operand.hbm [shape: f32[2,4,8], index: 3, kind: output, shape index: {0}]
  %s4 = inlined_call_operand.hbm [shape: f32[1,2,128], index: 4, kind: output, shape index: {1}]
  %5 = xla_tuple %s3, %s4
  %s6 = sld [smem:[#allocation0]]
  $region34: #{tpu_custom_call.1} parent=0
    _
  %s8 = ssub.s32 1, %s6
  %s9 = scalar_select 0, %s8, %s6
  $region1: #{tpu_custom_call.1} parent=0
    #allocation2 [shape = 'u8[8192]{0}', space=vmem, size = 0x2000, scoped, tag = 'input window, operand 0, single buffered']
    #allocation3 [shape = 's32[1]{0}', space=sflag, size = 0x4, scoped, tag = 'scoped memory for tpu_custom_call.1']
    #allocation4 [shape = 's32[1]{0}', space=sflag, size = 0x4, scoped, tag = 'scoped memory for tpu_custom_call.1']
    #allocation5 [shape = 'u8[4096]{0}', space=vmem, size = 0x1000, scoped, tag = 'output window, operand 0, single buffered']
    #allocation6 [shape = 'u8[1024]{0}', space=vmem, size = 0x400, scoped, tag = 'output window, operand 1, single buffered']
    #allocation7 [shape = 's32[1]{0}', space=sflag, size = 0x4, scoped, tag = 'scoped memory for tpu_custom_call.1']
    %10 = vsyncpa [#allocation3], 0
    %11 = vsyncpa [#allocation4], 0
    %12 = vsyncpa [#allocation7], 0
    // Predicated region
    $region2: #{tpu_custom_call.1} parent=1 // pred_check
      _
    $region3: #{tpu_custom_call.1} parent=1 // pred_check_branch
      %14 = sbr.rel (0) target = $region5
    $region4: #{tpu_custom_call.1} parent=1 // pred_region
      %16 = vsyncadd [#allocation3], 0
      %s17 = sshll.u32 %s0, 4
      %s18 = int_to_ptr.hbm [resolvable:$true] %s17
      %s19 = sshll.u32 [#allocation2], 4
      %s20 = int_to_ptr.vmem [resolvable:$true] %s19
      %25 = dma.hbm_to_vmem [thread:$0]  %s18, 256, %s20, [#allocation3], 128, 128, 8
    $region5: #{tpu_custom_call.1} parent=1 // pred_fallthru
      _
    // Predicated region
    $region6: #{tpu_custom_call.1} parent=1 // pred_check
      _
    $region7: #{tpu_custom_call.1} parent=1 // pred_check_branch
      %27 = sbr.rel (0) target = $region9
    $region8: #{tpu_custom_call.1} parent=1 // pred_region
      _
    $region9: #{tpu_custom_call.1} parent=1 // pred_fallthru
      _
    // Predicated region
    $region10: #{tpu_custom_call.1} parent=1 // pred_check
      _
    $region11: #{tpu_custom_call.1} parent=1 // pred_check_branch
      %29 = sbr.rel (0) target = $region13
    $region12: #{tpu_custom_call.1} parent=1 // pred_region
      _
    $region13: #{tpu_custom_call.1} parent=1 // pred_fallthru
      _
    // Predicated region
    $region14: #{tpu_custom_call.1} parent=1 // pred_check
      _
    $region15: #{tpu_custom_call.1} parent=1 // pred_check_branch
      %31 = sbr.rel (0) target = $region17
    $region16: #{tpu_custom_call.1} parent=1 // pred_region
      %33 = dma.done [#allocation3], 256
    $region17: #{tpu_custom_call.1} parent=1 // pred_fallthru
      _
    %v34 = vld [vmem:[%s1] sm:$0xf]
    %v35 = vld [vmem:[%s2] sm:$0xf]
    %v36 = vld [vmem:[#allocation2] sm:$0xff]
    %v37 = vld [vmem:[#allocation2 + $0x8] sm:$0xff]
    %39 = vset.pattern.permute.xlu0 0
    %40 = vperm.xlu0 %39, %v35
    %v41 = vpop.permute.xlu0 %40
    %vm43 = vcmask 261120
    %v45 = vsel %vm43, %v34, 0
    %v48 = vsel %vm43, %v36, 0
    %v51 = vsel %vm43, %v37, 0
    %53 = vmatpush.xpose.msra.mxu0 0.0
    %54 = vmatpush.xpose.msra.mxu0 0.0
    %55 = vmatpush.xpose.msra.mxu0 0.0
    %56 = vmatpush.xpose.msra.mxu0 0.0
    %57 = vmatpush.xpose.msra.mxu0 0.0
    %58 = vmatpush.xpose.msra.mxu0 0.0
    %59 = vmatpush.xpose.msra.mxu0 0.0
    %60 = vmatpush.xpose.msra.mxu0 0.0
    %61 = vmatpush.xpose.msra.mxu0 0.0
    %62 = vmatpush.xpose.msra.mxu0 0.0
    %63 = vmatpush.xpose.msra.mxu0 0.0
    %64 = vmatpush.xpose.msra.mxu0 0.0
    %65 = vmatpush.xpose.msra.mxu0 0.0
    %66 = vmatpush.xpose.msra.mxu0 0.0
    %67 = vmatpush.xpose.msra.mxu0 %v51
    %68 = vmatpush.xpose.msra.mxu0 %v48
    %69 = vmatmul.f32.gmra.mxu0 %v45
    %v70 = vpop.f32.mrf.mxu0
    %v71 = vadd.f32 %v41, %v70
    %72 = vdwg.mxu0
    %v73 = vmax.f32 %v71, 0.0
    %vm74 = vcmask 60416
    %75 = vst.msk [vmem:[#allocation5] sm:$0xf] %vm74, %v73
    %v76 = vld [vmem:[#allocation2] sm:$0xff]
    %vm77 = vcmask 64512
    %v79 = vsel %vm77, %v73, 0
    %81 = vmatpush.msra.mxu0 0.0
    %82 = vmatpush.msra.mxu0 0.0
    %83 = vmatpush.msra.mxu0 0.0
    %84 = vmatpush.msra.mxu0 0.0
    %85 = vmatpush.msra.mxu0 0.0
    %86 = vmatpush.msra.mxu0 0.0
    %87 = vmatpush.msra.mxu0 0.0
    %88 = vmatpush.msra.mxu0 0.0
    %89 = vmatpush.msra.mxu0 0.0
    %90 = vmatpush.msra.mxu0 0.0
    %91 = vmatpush.msra.mxu0 0.0
    %92 = vmatpush.msra.mxu0 0.0
    %93 = vmatpush.msra.mxu0 0.0
    %94 = vmatpush.msra.mxu0 0.0
    %95 = vmatpush.msra.mxu0 0.0
    %96 = vmatpush.msra.mxu0 %v76
    %97 = vmatmul.f32.gmra.mxu0 %v79
    %v98 = vpop.f32.mrf.mxu0
    %v99 = vadd.f32 0.0, %v98
    %100 = vdwg.mxu0
    %v102 = vrot.slane %v99, 1
    %103 = vrot.lane.b32.xlu0 %v102, 32
    %v104 = vpop.permute.xlu0 %103
    %v106 = vrot.slane %v99, 2
    %107 = vrot.lane.b32.xlu0 %v106, 64
    %v108 = vpop.permute.xlu0 %107
    %v110 = vrot.slane %v99, 3
    %111 = vrot.lane.b32.xlu0 %v110, 96
    %v112 = vpop.permute.xlu0 %111
    %v114 = vsel %vm43, %v99, %v104
    %vm115 = vcmask 523264
    %v116 = vsel %vm115, %v114, %v108
    %vm117 = vcmask 785408
    %v118 = vsel %vm117, %v116, %v112
    %119 = vrot.lane.b32.xlu0 %v73, 120
    %v120 = vpop.permute.xlu0 %119
    %s122 = scalar_lea.vmem [#allocation5], 4
    %123 = vst.msk [vmem:[%s122] sm:$0xf] %vm74, %v120
    %s124 = scalar_lea.vmem [#allocation2], 8
    %v125 = vld [vmem:[%s124] sm:$0xff]
    %v126 = vsel %vm77, %v120, 0
    %128 = vmatpush.msra.mxu0 0.0
    %129 = vmatpush.msra.mxu0 0.0
    %130 = vmatpush.msra.mxu0 0.0
    %131 = vmatpush.msra.mxu0 0.0
    %132 = vmatpush.msra.mxu0 0.0
    %133 = vmatpush.msra.mxu0 0.0
    %134 = vmatpush.msra.mxu0 0.0
    %135 = vmatpush.msra.mxu0 0.0
    %136 = vmatpush.msra.mxu0 0.0
    %137 = vmatpush.msra.mxu0 0.0
    %138 = vmatpush.msra.mxu0 0.0
    %139 = vmatpush.msra.mxu0 0.0
    %140 = vmatpush.msra.mxu0 0.0
    %141 = vmatpush.msra.mxu0 0.0
    %142 = vmatpush.msra.mxu0 0.0
    %143 = vmatpush.msra.mxu0 %v125
    %144 = vmatmul.f32.gmra.mxu0 %v126
    %v145 = vpop.f32.mrf.mxu0
    %v146 = vadd.f32 0.0, %v145
    %147 = vdwg.mxu0
    %v149 = vrot.slane %v146, 1
    %150 = vrot.lane.b32.xlu0 %v149, 32
    %v151 = vpop.permute.xlu0 %150
    %v153 = vrot.slane %v146, 2
    %154 = vrot.lane.b32.xlu0 %v153, 64
    %v155 = vpop.permute.xlu0 %154
    %v157 = vrot.slane %v146, 3
    %158 = vrot.lane.b32.xlu0 %v157, 96
    %v159 = vpop.permute.xlu0 %158
    %v161 = vsel %vm43, %v146, %v151
    %v162 = vsel %vm115, %v161, %v155
    %v163 = vsel %vm117, %v162, %v159
    %v165 = vrot.slane %v163, 7
    %vm167 = vcmask 1040384
    %v168 = vsel %vm167, %v118, %v165
    %169 = vst [vmem:[#allocation6] sm:$0x3] %v168
    // Predicated region
    $region18: #{tpu_custom_call.1} parent=1 // pred_check
      _
    $region19: #{tpu_custom_call.1} parent=1 // pred_check_branch
      %171 = sbr.rel (0) target = $region21
    $region20: #{tpu_custom_call.1} parent=1 // pred_region
      %173 = vsyncadd [#allocation4], 0
      %s174 = sshll.u32 [#allocation5], 4
      %s175 = int_to_ptr.vmem [resolvable:$true] %s174
      %s176 = sshll.u32 %s3, 4
      %s177 = int_to_ptr.hbm [resolvable:$true] %s176
      %182 = dma.vmem_to_hbm [thread:$0]  %s175, 128, %s177, [#allocation4], 64, 64, 4
    $region21: #{tpu_custom_call.1} parent=1 // pred_fallthru
      _
    // Predicated region
    $region22: #{tpu_custom_call.1} parent=1 // pred_check
      _
    $region23: #{tpu_custom_call.1} parent=1 // pred_check_branch
      %184 = sbr.rel (0) target = $region25
    $region24: #{tpu_custom_call.1} parent=1 // pred_region
      %186 = vsyncadd [#allocation7], 0
      %s188 = sshll.u32 [#allocation6], 4
      %s189 = int_to_ptr.vmem [resolvable:$true] %s188
      %s190 = sshll.u32 %s4, 4
      %s191 = int_to_ptr.hbm [resolvable:$true] %s190
      %193 = dma.vmem_to_hbm [thread:$0]  %s189, 32, %s191, [#allocation7]
    $region25: #{tpu_custom_call.1} parent=1 // pred_fallthru
      _
    // Predicated region
    $region26: #{tpu_custom_call.1} parent=1 // pred_check
      _
    $region27: #{tpu_custom_call.1} parent=1 // pred_check_branch
      %195 = sbr.rel (0) target = $region29
    $region28: #{tpu_custom_call.1} parent=1 // pred_region
      %197 = dma.done [#allocation4], 128
    $region29: #{tpu_custom_call.1} parent=1 // pred_fallthru
      _
    // Predicated region
    $region30: #{tpu_custom_call.1} parent=1 // pred_check
      _
    $region31: #{tpu_custom_call.1} parent=1 // pred_check_branch
      %199 = sbr.rel (0) target = $region33
    $region32: #{tpu_custom_call.1} parent=1 // pred_region
      %201 = dma.done [#allocation7], 32
    $region33: #{tpu_custom_call.1} parent=1 // pred_fallthru
      _
    %202 = vsyncpa [#allocation3], 1
    %203 = vsyncpa [#allocation4], 1
    %204 = vsyncpa [#allocation7], 1

</llo_original>
